<compile_context>
chip_gen: v7x
topology: tpu7x:2x2x1
jax: 0.10.0
libtpu: 0.0.40
codegen_flags: <defaults>
</compile_context>

<pallas_src>
import functools

import jax
import jax.numpy as jnp
from jax.experimental import pallas as pl
from jax.experimental.pallas import tpu as pltpu

LN_EPS = 1e-5          # nn.LayerNorm default
HEAD_WIDTH = 128       # fused actor+critic output slab width (lane-dense)


def _round_up(n, m):
    return (n + m - 1) // m * m


def _bf16_vpu_available():
    """bf16 VALU exists on v6e / v7x; v5e and older have no bf16 VPU."""
    try:
        kind = jax.devices()[0].device_kind.lower()
    except Exception:
        return False
    return ("v6" in kind) or ("v7" in kind)


def _ln_relu(h, gamma, beta, apply_dtype):
    """LayerNorm + ReLU.

    Reductions and rsqrt in f32; the full-width scale/shift/ReLU apply runs in
    `apply_dtype` (bf16 on v6e/v7x, f32 on v5e). Single-pass variance
    (E[x^2] - E[x]^2) removes one full-width pass.
    Note: all-zero padded batch rows give var == 0; LN_EPS > 0 keeps
    rsqrt finite, so padded rows cannot produce NaNs.
    """
    mu = jnp.mean(h, axis=-1, keepdims=True)
    ms = jnp.mean(h * h, axis=-1, keepdims=True)
    rstd = jax.lax.rsqrt(ms - mu * mu + LN_EPS)
    d = ((h - mu) * rstd).astype(apply_dtype)            # normalized, apply dtype
    y = d * gamma.astype(apply_dtype) + beta.astype(apply_dtype)
    return jnp.maximum(y, 0).astype(jnp.bfloat16)        # next MXU operand


def ppo_kernel(x_ref, w1_ref, w2_ref, wh_ref, vec_ref, out_ref,
               *, out_size, apply_dtype):
    # unpack the small-vector slab (f32): biases / LN gamma / LN beta / head bias
    b1 = vec_ref[0:1, :]
    g1 = vec_ref[1:2, :]
    be1 = vec_ref[2:3, :]
    b2 = vec_ref[3:4, :128]
    g2 = vec_ref[4:5, :128]
    be2 = vec_ref[5:6, :128]
    bh = vec_ref[6:7, :HEAD_WIDTH]

    # feature block 1: Linear(k_in, 256) -> LayerNorm -> ReLU  (bf16 MXU, f32 acc)
    x = x_ref[...].astype(jnp.bfloat16)
    h1 = jnp.dot(x, w1_ref[...], preferred_element_type=jnp.float32) + b1
    h1 = _ln_relu(h1, g1, be1, apply_dtype)

    # feature block 2: Linear(256, 128) -> LayerNorm -> ReLU
    h2 = jnp.dot(h1, w2_ref[...], preferred_element_type=jnp.float32) + b2
    h2 = _ln_relu(h2, g2, be2, apply_dtype)

    # fused actor+critic heads: single (128, 128) matmul
    heads = jnp.dot(h2, wh_ref[...], preferred_element_type=jnp.float32) + bh

    # softmax over actor lanes only (mask via lane index; value lane passes through)
    col = jax.lax.broadcasted_iota(jnp.int32, heads.shape, 1)
    actor_mask = col < out_size
    logits = jnp.where(actor_mask, heads, -jnp.inf)
    m = jnp.max(logits, axis=-1, keepdims=True)
    e = jnp.exp(logits - m)                # masked lanes -> exp(-inf) = 0
    s = jnp.sum(e, axis=-1, keepdims=True)
    probs = e / s                          # exact divide: (tb,1) denom, ~free

    # lanes [0,out) = probs; lane out = critic value; remaining lanes = 0 (zero wh cols)
    out_ref[...] = jnp.where(actor_mask, probs, heads).astype(out_ref.dtype)


def ppo_actor_critic_forward(x, packed, *, tb=1024):
    """x: (B, input_size).  packed: dict from pack_params()."""
    B, k_in = x.shape
    out_size = packed["out_size"]

    # Batch tile: big enough to amortize the ~0.35 us per-grid-step overhead,
    # clamped so the grid has >= 2 steps when possible (v7x megacore).
    tb = _round_up(min(tb, _round_up(max(B, 16), 16)), 16)
    if B > 16 and _round_up(B, tb) // tb < 2:
        tb = _round_up(-(-B // 2), 16)
    b_pad = _round_up(B, tb)

    # pad batch rows only (no K padding, no dtype-cast materialization)
    x_in = x if b_pad == B else jnp.pad(x, ((0, b_pad - B), (0, 0)))

    apply_dtype = jnp.bfloat16 if _bf16_vpu_available() else jnp.float32

    grid = (b_pad // tb,)
    in_specs = [
        pl.BlockSpec((tb, k_in), lambda i: (i, 0)),          # x tile (native width)
        pl.BlockSpec((k_in, 256), lambda i: (0, 0)),         # w1 (bf16, resident)
        pl.BlockSpec((256, 128), lambda i: (0, 0)),          # w2 (bf16, resident)
        pl.BlockSpec((128, HEAD_WIDTH), lambda i: (0, 0)),   # fused heads (bf16)
        pl.BlockSpec((8, 256), lambda i: (0, 0)),            # packed vectors (f32)
    ]
    out_specs = pl.BlockSpec((tb, HEAD_WIDTH), lambda i: (i, 0))

    itemsize = jnp.dtype(x_in.dtype).itemsize
    cost = pl.CostEstimate(
        flops=2 * b_pad * (k_in * 256 + 256 * 128 + 128 * HEAD_WIDTH),
        transcendentals=b_pad * (2 + HEAD_WIDTH),
        bytes_accessed=(b_pad * k_in * itemsize
                        + 2 * (k_in * 256 + 256 * 128 + 128 * HEAD_WIDTH)
                        + 8 * 256 * 4
                        + b_pad * HEAD_WIDTH * 2),
    )

    slab = pl.pallas_call(
        functools.partial(ppo_kernel, out_size=out_size, apply_dtype=apply_dtype),
        out_shape=jax.ShapeDtypeStruct((b_pad, HEAD_WIDTH), jnp.bfloat16),
        grid=grid,
        in_specs=in_specs,
        out_specs=out_specs,
        cost_estimate=cost,
        compiler_params=pltpu.CompilerParams(
            dimension_semantics=("parallel",)),
    )(x_in, packed["w1"], packed["w2"], packed["wh"], packed["vec"])

    probs = slab[:B, :out_size].astype(jnp.float32)
    value = slab[:B, out_size:out_size + 1].astype(jnp.float32)
    return probs, value


def init_params(key, input_size, output_size):
    """Natural (PyTorch-shaped, transposed) f32 parameters."""
    ks = jax.random.split(key, 8)

    def lin(kw, kb, fan_in, fan_out):
        bound = 1.0 / jnp.sqrt(fan_in)
        w = jax.random.uniform(kw, (fan_in, fan_out), jnp.float32, -bound, bound)
        b = jax.random.uniform(kb, (1, fan_out), jnp.float32, -bound, bound)
        return w, b

    w1, b1 = lin(ks[0], ks[1], input_size, 256)
    w2, b2 = lin(ks[2], ks[3], 256, 128)
    wa, ba = lin(ks[4], ks[5], 128, output_size)
    wc, bc = lin(ks[6], ks[7], 128, 1)
    return dict(
        w1=w1, b1=b1, g1=jnp.ones((1, 256), jnp.float32), be1=jnp.zeros((1, 256), jnp.float32),
        w2=w2, b2=b2, g2=jnp.ones((1, 128), jnp.float32), be2=jnp.zeros((1, 128), jnp.float32),
        wa=wa, ba=ba, wc=wc, bc=bc,
    )


def pack_params(p, input_size, output_size):
    """bf16 matmul weights, fused actor+critic head slab, packed f32 vector slab."""
    assert 0 < output_size and output_size + 1 <= HEAD_WIDTH, \
        "fused head slab requires 0 < output_size and output_size + 1 <= 128"

    wh = (jnp.zeros((128, HEAD_WIDTH), jnp.float32)
          .at[:, :output_size].set(p["wa"])
          .at[:, output_size:output_size + 1].set(p["wc"]))
    bh = (jnp.zeros((1, HEAD_WIDTH), jnp.float32)
          .at[:, :output_size].set(p["ba"])
          .at[:, output_size:output_size + 1].set(p["bc"]))

    vec = (jnp.zeros((8, 256), jnp.float32)
           .at[0:1, :].set(p["b1"])
           .at[1:2, :].set(p["g1"])
           .at[2:3, :].set(p["be1"])
           .at[3:4, :128].set(p["b2"])
           .at[4:5, :128].set(p["g2"])
           .at[5:6, :128].set(p["be2"])
           .at[6:7, :HEAD_WIDTH].set(bh))

    return dict(
        w1=p["w1"].astype(jnp.bfloat16),
        w2=p["w2"].astype(jnp.bfloat16),
        wh=wh.astype(jnp.bfloat16),
        vec=vec,
        out_size=output_size,
    )


def reference_forward(x, p):
    def ln(h, g, b):
        mu = jnp.mean(h, axis=-1, keepdims=True)
        var = jnp.mean((h - mu) ** 2, axis=-1, keepdims=True)
        return (h - mu) / jnp.sqrt(var + LN_EPS) * g + b
    h = jnp.maximum(ln(x @ p["w1"] + p["b1"], p["g1"], p["be1"]), 0.0)
    h = jnp.maximum(ln(h @ p["w2"] + p["b2"], p["g2"], p["be2"]), 0.0)
    probs = jax.nn.softmax(h @ p["wa"] + p["ba"], axis=-1)
    value = h @ p["wc"] + p["bc"]
    return probs, value


if __name__ == "__main__":
    key = jax.random.PRNGKey(0)
    k_x, k_p = jax.random.split(key)

    batch, input_size, output_size = 8, 32, 8
    x = jax.random.normal(k_x, (batch, input_size), jnp.float32)
    params = init_params(k_p, input_size, output_size)
    packed = pack_params(params, input_size, output_size)

    probs, value = ppo_actor_critic_forward(x, packed)
    jax.block_until_ready((probs, value))

    ref_probs, ref_value = reference_forward(x, params)
    assert probs.shape == (batch, output_size) and value.shape == (batch, 1)
    # bf16 matmul operands + bf16 output slab -> looser tolerance vs f32 reference
    assert jnp.allclose(jnp.sum(probs, axis=-1), 1.0, atol=1e-2)
    assert jnp.allclose(probs, ref_probs, atol=5e-2, rtol=5e-2)
    assert jnp.allclose(value, ref_value, atol=5e-2, rtol=5e-2)

    print("KERNEL_OK")
</pallas_src>

<mosaic_0001>
module attributes {stable_mosaic.version = 11 : i64} {
  func.func @ppo_kernel(%arg0: i32, %arg1: memref<16x32xf32, #tpu.memory_space<vmem>>, %arg2: memref<32x256xbf16, #tpu.memory_space<vmem>>, %arg3: memref<256x128xbf16, #tpu.memory_space<vmem>>, %arg4: memref<128x128xbf16, #tpu.memory_space<vmem>>, %arg5: memref<8x256xf32, #tpu.memory_space<vmem>>, %arg6: memref<16x128xbf16, #tpu.memory_space<vmem>>) attributes {dimension_semantics = [#tpu.dimension_semantics<parallel>], iteration_bounds = array<i64: 1>, scalar_prefetch = 0 : i64, scratch_operands = 0 : i64, tpu.core_type = #tpu.core_type<tc>, window_params = [{transform_indices = @transform_0, window_bounds = array<i64: 16, 32>}, {pipeline_mode = #tpu.pipeline_mode<synchronous>, transform_indices = @transform_1, window_bounds = array<i64: 32, 256>}, {pipeline_mode = #tpu.pipeline_mode<synchronous>, transform_indices = @transform_2, window_bounds = array<i64: 256, 128>}, {pipeline_mode = #tpu.pipeline_mode<synchronous>, transform_indices = @transform_3, window_bounds = array<i64: 128, 128>}, {pipeline_mode = #tpu.pipeline_mode<synchronous>, transform_indices = @transform_4, window_bounds = array<i64: 8, 256>}, {transform_indices = @transform_5, window_bounds = array<i64: 16, 128>}]} {
    %c0 = arith.constant 0 : index
    %c0_0 = arith.constant 0 : index
    %0 = vector.load %arg5[%c0, %c0_0] : memref<8x256xf32, #tpu.memory_space<vmem>>, vector<1x256xf32>
    %c1 = arith.constant 1 : index
    %c0_1 = arith.constant 0 : index
    %1 = vector.load %arg5[%c1, %c0_1] : memref<8x256xf32, #tpu.memory_space<vmem>>, vector<1x256xf32>
    %c2 = arith.constant 2 : index
    %c0_2 = arith.constant 0 : index
    %2 = vector.load %arg5[%c2, %c0_2] : memref<8x256xf32, #tpu.memory_space<vmem>>, vector<1x256xf32>
    %c3 = arith.constant 3 : index
    %c0_3 = arith.constant 0 : index
    %3 = vector.load %arg5[%c3, %c0_3] : memref<8x256xf32, #tpu.memory_space<vmem>>, vector<1x128xf32>
    %c4 = arith.constant 4 : index
    %c0_4 = arith.constant 0 : index
    %4 = vector.load %arg5[%c4, %c0_4] : memref<8x256xf32, #tpu.memory_space<vmem>>, vector<1x128xf32>
    %c5 = arith.constant 5 : index
    %c0_5 = arith.constant 0 : index
    %5 = vector.load %arg5[%c5, %c0_5] : memref<8x256xf32, #tpu.memory_space<vmem>>, vector<1x128xf32>
    %c6 = arith.constant 6 : index
    %c0_6 = arith.constant 0 : index
    %6 = vector.load %arg5[%c6, %c0_6] : memref<8x256xf32, #tpu.memory_space<vmem>>, vector<1x128xf32>
    %c0_7 = arith.constant 0 : index
    %c0_8 = arith.constant 0 : index
    %7 = vector.load %arg1[%c0_7, %c0_8] : memref<16x32xf32, #tpu.memory_space<vmem>>, vector<16x32xf32>
    %8 = arith.truncf %7 : vector<16x32xf32> to vector<16x32xbf16>
    %c0_9 = arith.constant 0 : index
    %c0_10 = arith.constant 0 : index
    %9 = vector.load %arg2[%c0_9, %c0_10] : memref<32x256xbf16, #tpu.memory_space<vmem>>, vector<32x256xbf16>
    %cst = arith.constant dense<0.000000e+00> : vector<16x256xf32>
    %10 = tpu.matmul %8, %9, %cst {dimension_numbers = #tpu.dot_dimension_numbers<[1], [0], [0], [1], [0, 0, 1, 1], [], []>} : vector<16x32xbf16>, vector<32x256xbf16>, vector<16x256xf32> -> vector<16x256xf32>
    %11 = vector.broadcast %0 : vector<1x256xf32> to vector<16x256xf32>
    %12 = arith.addf %10, %11 : vector<16x256xf32>
    %cst_11 = arith.constant dense<0.000000e+00> : vector<16xf32>
    %13 = vector.multi_reduction <add>, %12, %cst_11 [1] : vector<16x256xf32> to vector<16xf32>
    %14 = vector.shape_cast %13 : vector<16xf32> to vector<16x1xf32>
    %cst_12 = arith.constant 2.560000e+02 : f32
    %15 = vector.broadcast %cst_12 : f32 to vector<16x1xf32>
    %16 = arith.divf %14, %15 : vector<16x1xf32>
    %17 = arith.mulf %12, %12 : vector<16x256xf32>
    %cst_13 = arith.constant dense<0.000000e+00> : vector<16xf32>
    %18 = vector.multi_reduction <add>, %17, %cst_13 [1] : vector<16x256xf32> to vector<16xf32>
    %19 = vector.shape_cast %18 : vector<16xf32> to vector<16x1xf32>
    %cst_14 = arith.constant 2.560000e+02 : f32
    %20 = vector.broadcast %cst_14 : f32 to vector<16x1xf32>
    %21 = arith.divf %19, %20 : vector<16x1xf32>
    %22 = arith.mulf %16, %16 : vector<16x1xf32>
    %23 = arith.subf %21, %22 : vector<16x1xf32>
    %cst_15 = arith.constant 9.99999974E-6 : f32
    %24 = vector.broadcast %cst_15 : f32 to vector<16x1xf32>
    %25 = arith.addf %23, %24 : vector<16x1xf32>
    %26 = math.rsqrt %25 : vector<16x1xf32>
    %27 = vector.broadcast %16 : vector<16x1xf32> to vector<16x256xf32>
    %28 = arith.subf %12, %27 : vector<16x256xf32>
    %29 = vector.broadcast %26 : vector<16x1xf32> to vector<16x256xf32>
    %30 = arith.mulf %28, %29 : vector<16x256xf32>
    %31 = vector.broadcast %1 : vector<1x256xf32> to vector<16x256xf32>
    %32 = arith.mulf %30, %31 : vector<16x256xf32>
    %33 = vector.broadcast %2 : vector<1x256xf32> to vector<16x256xf32>
    %34 = arith.addf %32, %33 : vector<16x256xf32>
    %cst_16 = arith.constant 0.000000e+00 : f32
    %35 = vector.broadcast %cst_16 : f32 to vector<16x256xf32>
    %36 = arith.maximumf %34, %35 : vector<16x256xf32>
    %37 = arith.truncf %36 : vector<16x256xf32> to vector<16x256xbf16>
    %c0_17 = arith.constant 0 : index
    %c0_18 = arith.constant 0 : index
    %38 = vector.load %arg3[%c0_17, %c0_18] : memref<256x128xbf16, #tpu.memory_space<vmem>>, vector<256x128xbf16>
    %cst_19 = arith.constant dense<0.000000e+00> : vector<16x128xf32>
    %39 = tpu.matmul %37, %38, %cst_19 {dimension_numbers = #tpu.dot_dimension_numbers<[1], [0], [0], [1], [0, 0, 1, 1], [], []>} : vector<16x256xbf16>, vector<256x128xbf16>, vector<16x128xf32> -> vector<16x128xf32>
    %40 = vector.broadcast %3 : vector<1x128xf32> to vector<16x128xf32>
    %41 = arith.addf %39, %40 : vector<16x128xf32>
    %cst_20 = arith.constant dense<0.000000e+00> : vector<16xf32>
    %42 = vector.multi_reduction <add>, %41, %cst_20 [1] : vector<16x128xf32> to vector<16xf32>
    %43 = vector.shape_cast %42 : vector<16xf32> to vector<16x1xf32>
    %cst_21 = arith.constant 1.280000e+02 : f32
    %44 = vector.broadcast %cst_21 : f32 to vector<16x1xf32>
    %45 = arith.divf %43, %44 : vector<16x1xf32>
    %46 = arith.mulf %41, %41 : vector<16x128xf32>
    %cst_22 = arith.constant dense<0.000000e+00> : vector<16xf32>
    %47 = vector.multi_reduction <add>, %46, %cst_22 [1] : vector<16x128xf32> to vector<16xf32>
    %48 = vector.shape_cast %47 : vector<16xf32> to vector<16x1xf32>
    %cst_23 = arith.constant 1.280000e+02 : f32
    %49 = vector.broadcast %cst_23 : f32 to vector<16x1xf32>
    %50 = arith.divf %48, %49 : vector<16x1xf32>
    %51 = arith.mulf %45, %45 : vector<16x1xf32>
    %52 = arith.subf %50, %51 : vector<16x1xf32>
    %cst_24 = arith.constant 9.99999974E-6 : f32
    %53 = vector.broadcast %cst_24 : f32 to vector<16x1xf32>
    %54 = arith.addf %52, %53 : vector<16x1xf32>
    %55 = math.rsqrt %54 : vector<16x1xf32>
    %56 = vector.broadcast %45 : vector<16x1xf32> to vector<16x128xf32>
    %57 = arith.subf %41, %56 : vector<16x128xf32>
    %58 = vector.broadcast %55 : vector<16x1xf32> to vector<16x128xf32>
    %59 = arith.mulf %57, %58 : vector<16x128xf32>
    %60 = vector.broadcast %4 : vector<1x128xf32> to vector<16x128xf32>
    %61 = arith.mulf %59, %60 : vector<16x128xf32>
    %62 = vector.broadcast %5 : vector<1x128xf32> to vector<16x128xf32>
    %63 = arith.addf %61, %62 : vector<16x128xf32>
    %cst_25 = arith.constant 0.000000e+00 : f32
    %64 = vector.broadcast %cst_25 : f32 to vector<16x128xf32>
    %65 = arith.maximumf %63, %64 : vector<16x128xf32>
    %66 = arith.truncf %65 : vector<16x128xf32> to vector<16x128xbf16>
    %c0_26 = arith.constant 0 : index
    %c0_27 = arith.constant 0 : index
    %67 = vector.load %arg4[%c0_26, %c0_27] : memref<128x128xbf16, #tpu.memory_space<vmem>>, vector<128x128xbf16>
    %cst_28 = arith.constant dense<0.000000e+00> : vector<16x128xf32>
    %68 = tpu.matmul %66, %67, %cst_28 {dimension_numbers = #tpu.dot_dimension_numbers<[1], [0], [0], [1], [0, 0, 1, 1], [], []>} : vector<16x128xbf16>, vector<128x128xbf16>, vector<16x128xf32> -> vector<16x128xf32>
    %69 = vector.broadcast %6 : vector<1x128xf32> to vector<16x128xf32>
    %70 = arith.addf %68, %69 : vector<16x128xf32>
    %71 = tpu.iota {dimensions = array<i32: 1>} : vector<16x128xi32>
    %c8_i32 = arith.constant 8 : i32
    %72 = vector.broadcast %c8_i32 : i32 to vector<16x128xi32>
    %73 = arith.cmpi slt, %71, %72 : vector<16x128xi32>
    %cst_29 = arith.constant 0xFF800000 : f32
    %74 = vector.broadcast %cst_29 : f32 to vector<16x128xf32>
    %75 = arith.select %73, %70, %74 : vector<16x128xi1>, vector<16x128xf32>
    %cst_30 = arith.constant dense<0xFF800000> : vector<16xf32>
    %76 = vector.multi_reduction <maximumf>, %75, %cst_30 [1] : vector<16x128xf32> to vector<16xf32>
    %77 = vector.shape_cast %76 : vector<16xf32> to vector<16x1xf32>
    %78 = vector.broadcast %77 : vector<16x1xf32> to vector<16x128xf32>
    %79 = arith.subf %75, %78 : vector<16x128xf32>
    %80 = math.exp %79 : vector<16x128xf32>
    %cst_31 = arith.constant dense<0.000000e+00> : vector<16xf32>
    %81 = vector.multi_reduction <add>, %80, %cst_31 [1] : vector<16x128xf32> to vector<16xf32>
    %82 = vector.shape_cast %81 : vector<16xf32> to vector<16x1xf32>
    %83 = vector.broadcast %82 : vector<16x1xf32> to vector<16x128xf32>
    %84 = arith.divf %80, %83 : vector<16x128xf32>
    %85 = arith.select %73, %84, %70 : vector<16x128xi1>, vector<16x128xf32>
    %86 = arith.truncf %85 : vector<16x128xf32> to vector<16x128xbf16>
    %c0_32 = arith.constant 0 : index
    %c0_33 = arith.constant 0 : index
    %87 = vector.load %arg6[%c0_32, %c0_33] : memref<16x128xbf16, #tpu.memory_space<vmem>>, vector<16x128xbf16>
    tpu.vector_store %arg6[%c0_32, %c0_33], %86 {strides = array<i32>} : memref<16x128xbf16, #tpu.memory_space<vmem>>, vector<16x128xbf16>,
    return
  }
  func.func @transform_0(%arg0: i32) -> (i32, i32) {
    %c0_i32 = arith.constant 0 : i32
    %c0_i32_0 = arith.constant 0 : i32
    return %arg0, %c0_i32 : i32, i32
  }
  func.func @transform_1(%arg0: i32) -> (i32, i32) {
    %c0_i32 = arith.constant 0 : i32
    %c0_i32_0 = arith.constant 0 : i32
    %c0_i32_1 = arith.constant 0 : i32
    return %c0_i32, %c0_i32_0 : i32, i32
  }
  func.func @transform_2(%arg0: i32) -> (i32, i32) {
    %c0_i32 = arith.constant 0 : i32
    %c0_i32_0 = arith.constant 0 : i32
    %c0_i32_1 = arith.constant 0 : i32
    return %c0_i32, %c0_i32_0 : i32, i32
  }
  func.func @transform_3(%arg0: i32) -> (i32, i32) {
    %c0_i32 = arith.constant 0 : i32
    %c0_i32_0 = arith.constant 0 : i32
    %c0_i32_1 = arith.constant 0 : i32
    return %c0_i32, %c0_i32_0 : i32, i32
  }
  func.func @transform_4(%arg0: i32) -> (i32, i32) {
    %c0_i32 = arith.constant 0 : i32
    %c0_i32_0 = arith.constant 0 : i32
    %c0_i32_1 = arith.constant 0 : i32
    return %c0_i32, %c0_i32_0 : i32, i32
  }
  func.func @transform_5(%arg0: i32) -> (i32, i32) {
    %c0_i32 = arith.constant 0 : i32
    %c0_i32_0 = arith.constant 0 : i32
    return %arg0, %c0_i32 : i32, i32
  }
}

</mosaic_0001>

<llo_original>
// kernel: tpu_custom_call.1
$region0: #{tpu_custom_call.1}
  #allocation0 [shape = 'u32[]', space=smem, size = 0x4, offset = 0x4, fixed_abs, tag = 'smem constant byte address 0x4 - core index']
  #allocation1 [shape = 'u32[144,128]{1,0:T(1,128)}', space=vmem, size = 0x12000, scoped, tag = 'internal scratch']
  %s0 = inlined_call_operand.hbm [shape: f32[16,32], index: 0, kind: input, shape index: {}]
  %s1 = inlined_call_operand.hbm [shape: bf16[32,256], index: 1, kind: input, shape index: {}]
  %s2 = inlined_call_operand.hbm [shape: bf16[256,128], index: 2, kind: input, shape index: {}]
  %s3 = inlined_call_operand.hbm [shape: bf16[128,128], index: 3, kind: input, shape index: {}]
  %s4 = inlined_call_operand.hbm [shape: f32[8,256], index: 4, kind: input, shape index: {}]
  %s5 = inlined_call_operand.hbm [shape: bf16[16,128], index: 5, kind: output, shape index: {}]
  %s6 = sld [smem:[#allocation0]]
  $region50: #{tpu_custom_call.1} parent=0
    _
  %s8 = ssub.s32 1, %s6
  %s9 = scalar_select 0, %s8, %s6
  $region1: #{tpu_custom_call.1} parent=0
    #allocation2 [shape = 'u8[8192]{0}', space=vmem, size = 0x2000, scoped, tag = 'input window, operand 0, single buffered']
    #allocation3 [shape = 's32[1]{0}', space=sflag, size = 0x4, scoped, tag = 'scoped memory for tpu_custom_call.1']
    #allocation4 [shape = 's32[1]{0}', space=sflag, size = 0x4, scoped, tag = 'scoped memory for tpu_custom_call.1']
    #allocation5 [shape = 'u8[16384]{0}', space=vmem, size = 0x4000, scoped, tag = 'input window, operand 1, single buffered']
    #allocation6 [shape = 's32[1]{0}', space=sflag, size = 0x4, scoped, tag = 'scoped memory for tpu_custom_call.1']
    #allocation7 [shape = 'u8[65536]{0}', space=vmem, size = 0x10000, scoped, tag = 'input window, operand 2, single buffered']
    #allocation8 [shape = 'u8[32768]{0}', space=vmem, size = 0x8000, scoped, tag = 'input window, operand 3, single buffered']
    #allocation9 [shape = 's32[1]{0}', space=sflag, size = 0x4, scoped, tag = 'scoped memory for tpu_custom_call.1']
    #allocation10 [shape = 'u8[8192]{0}', space=vmem, size = 0x2000, scoped, tag = 'input window, operand 4, single buffered']
    #allocation11 [shape = 'u8[4096]{0}', space=vmem, size = 0x1000, scoped, tag = 'output window, operand 0, single buffered']
    %10 = vsyncpa [#allocation3], 0
    %11 = vsyncpa [#allocation6], 0
    %12 = vsyncpa [#allocation9], 0
    %13 = vsyncpa [#allocation4], 0
    // Predicated region
    $region2: #{tpu_custom_call.1} parent=1 // pred_check
      _
    $region3: #{tpu_custom_call.1} parent=1 // pred_check_branch
      %15 = sbr.rel (0) target = $region5
    $region4: #{tpu_custom_call.1} parent=1 // pred_region
      %s17 = ssub.s32 256, 256
      %18 = vsyncadd [#allocation3], %s17
      %s19 = sshll.u32 [#allocation2], 4
      %s20 = int_to_ptr.vmem [resolvable:$true] %s19
      %25 = dma.hbm_to_vmem [thread:$0]  %s0, 256, %s20, [#allocation3], 128, 128, 8
    $region5: #{tpu_custom_call.1} parent=1 // pred_fallthru
      _
    // Predicated region
    $region6: #{tpu_custom_call.1} parent=1 // pred_check
      _
    $region7: #{tpu_custom_call.1} parent=1 // pred_check_branch
      %27 = sbr.rel (0) target = $region9
    $region8: #{tpu_custom_call.1} parent=1 // pred_region
      %s29 = ssub.s32 512, 512
      %30 = vsyncadd [#allocation6], %s29
      %s31 = sshll.u32 [#allocation5], 4
      %s32 = int_to_ptr.vmem [resolvable:$true] %s31
      %37 = dma.hbm_to_vmem [thread:$0]  %s1, 512, %s32, [#allocation6], 128, 128, 8
    $region9: #{tpu_custom_call.1} parent=1 // pred_fallthru
      _
    // Predicated region
    $region10: #{tpu_custom_call.1} parent=1 // pred_check
      _
    $region11: #{tpu_custom_call.1} parent=1 // pred_check_branch
      %39 = sbr.rel (0) target = $region13
    $region12: #{tpu_custom_call.1} parent=1 // pred_region
      %s41 = ssub.s32 2048, 2048
      %42 = vsyncadd [#allocation6], %s41
      %s43 = sshll.u32 [#allocation7], 4
      %s44 = int_to_ptr.vmem [resolvable:$true] %s43
      %49 = dma.hbm_to_vmem [thread:$0]  %s2, 2048, %s44, [#allocation6], 64, 64, 4
    $region13: #{tpu_custom_call.1} parent=1 // pred_fallthru
      _
    // Predicated region
    $region14: #{tpu_custom_call.1} parent=1 // pred_check
      _
    $region15: #{tpu_custom_call.1} parent=1 // pred_check_branch
      %51 = sbr.rel (0) target = $region17
    $region16: #{tpu_custom_call.1} parent=1 // pred_region
      %s53 = ssub.s32 1024, 1024
      %54 = vsyncadd [#allocation9], %s53
      %s55 = sshll.u32 [#allocation8], 4
      %s56 = int_to_ptr.vmem [resolvable:$true] %s55
      %61 = dma.hbm_to_vmem [thread:$0]  %s3, 1024, %s56, [#allocation9], 64, 64, 4
    $region17: #{tpu_custom_call.1} parent=1 // pred_fallthru
      _
    // Predicated region
    $region18: #{tpu_custom_call.1} parent=1 // pred_check
      _
    $region19: #{tpu_custom_call.1} parent=1 // pred_check_branch
      %63 = sbr.rel (0) target = $region21
    $region20: #{tpu_custom_call.1} parent=1 // pred_region
      %s65 = ssub.s32 256, 256
      %66 = vsyncadd [#allocation9], %s65
      %s68 = sshll.u32 [#allocation10], 4
      %s69 = int_to_ptr.vmem [resolvable:$true] %s68
      %71 = dma.hbm_to_vmem [thread:$0]  %s4, 256, %s69, [#allocation9]
    $region21: #{tpu_custom_call.1} parent=1 // pred_fallthru
      _
    // Predicated region
    $region22: #{tpu_custom_call.1} parent=1 // pred_check
      _
    $region23: #{tpu_custom_call.1} parent=1 // pred_check_branch
      %73 = sbr.rel (0) target = $region25
    $region24: #{tpu_custom_call.1} parent=1 // pred_region
      %74 = dma.done [#allocation3], 256
    $region25: #{tpu_custom_call.1} parent=1 // pred_fallthru
      _
    // Predicated region
    $region26: #{tpu_custom_call.1} parent=1 // pred_check
      _
    $region27: #{tpu_custom_call.1} parent=1 // pred_check_branch
      %76 = sbr.rel (0) target = $region29
    $region28: #{tpu_custom_call.1} parent=1 // pred_region
      %77 = dma.done [#allocation6], 512
    $region29: #{tpu_custom_call.1} parent=1 // pred_fallthru
      _
    // Predicated region
    $region30: #{tpu_custom_call.1} parent=1 // pred_check
      _
    $region31: #{tpu_custom_call.1} parent=1 // pred_check_branch
      %79 = sbr.rel (0) target = $region33
    $region32: #{tpu_custom_call.1} parent=1 // pred_region
      %80 = dma.done [#allocation6], 2048
    $region33: #{tpu_custom_call.1} parent=1 // pred_fallthru
      _
    // Predicated region
    $region34: #{tpu_custom_call.1} parent=1 // pred_check
      _
    $region35: #{tpu_custom_call.1} parent=1 // pred_check_branch
      %82 = sbr.rel (0) target = $region37
    $region36: #{tpu_custom_call.1} parent=1 // pred_region
      %83 = dma.done [#allocation9], 1024
    $region37: #{tpu_custom_call.1} parent=1 // pred_fallthru
      _
    // Predicated region
    $region38: #{tpu_custom_call.1} parent=1 // pred_check
      _
    $region39: #{tpu_custom_call.1} parent=1 // pred_check_branch
      %85 = sbr.rel (0) target = $region41
    $region40: #{tpu_custom_call.1} parent=1 // pred_region
      %86 = dma.done [#allocation9], 256
    $region41: #{tpu_custom_call.1} parent=1 // pred_fallthru
      _
    %v88 = vld [vmem:[#allocation10] ss:$8 sm:$0x3]
    %s89 = scalar_lea.vmem [#allocation10], 1
    %v90 = vld [vmem:[%s89] ss:$8 sm:$0x3]
    %s91 = scalar_lea.vmem [#allocation10], 2
    %v92 = vld [vmem:[%s91] ss:$8 sm:$0x3]
    %v93 = vld [vmem:[#allocation10 + $0x3] ss:$0 sm:$0xff]
    %v94 = vld [vmem:[#allocation10 + $0x4] ss:$0 sm:$0xff]
    %v95 = vld [vmem:[#allocation10 + $0x5] ss:$0 sm:$0xff]
    %v96 = vld [vmem:[#allocation10 + $0x6] ss:$0 sm:$0xff]
    %v97 = vld [vmem:[#allocation2] sm:$0xff]
    %v98 = vld [vmem:[#allocation2 + $0x8] sm:$0xff]
    %v99 = vpack.c.bf16 %v98, %v97
    %v100 = vld [vmem:[#allocation5] sm:$0xff]
    %v101 = vld [vmem:[#allocation5 + $0x8] sm:$0xff]
    %v102 = vld [vmem:[#allocation5 + $0x10] sm:$0xff]
    %v103 = vld [vmem:[#allocation5 + $0x18] sm:$0xff]
    %v105 = vlaneseq
    %v106 = vshrl.u32 %v105, 7
    %v107 = vsub.s32 0, %v106
    %v108 = vrot.slane %v88, %v107
    %v109 = vlaneseq
    %v110 = vshrl.u32 %v109, 7
    %v111 = vsub.s32 1, %v110
    %v112 = vrot.slane %v88, %v111
    %v119 = vunpack.c.l.b16 %v100
    %v120 = vunpack.c.h.b16 %v100
    %v121 = vunpack.c.l.b16 %v101
    %v122 = vunpack.c.h.b16 %v101
    %v123 = vunpack.c.l.b16 %v102
    %v124 = vunpack.c.h.b16 %v102
    %v125 = vunpack.c.l.b16 %v103
    %v126 = vunpack.c.h.b16 %v103
    %v127 = vpack.c.b16 %v121, %v119
    %v128 = vpack.c.b16 %v122, %v120
    %v129 = vpack.c.b16 %v125, %v123
    %v130 = vpack.c.b16 %v126, %v124
    %vm135 = vcmask 261120
    %v137 = vsel %vm135, %v99, 0
    %139 = vmatprep.subr.bf16.mxu0 %v128
    %140 = vmatpush1.bf16.msra.mxu0 %v127
    %141 = vmatprep.subr.bf16.mxu0 %v130
    %142 = vmatpush1.bf16.msra.mxu0 %v129
    %143 = vmatprep.subr.bf16.mxu0 0
    %144 = vmatpush1.bf16.msra.mxu0 0
    %145 = vmatprep.subr.bf16.mxu0 0
    %146 = vmatpush1.bf16.msra.mxu0 0
    %147 = vmatprep.subr.bf16.mxu0 0
    %148 = vmatpush1.bf16.msra.mxu0 0
    %149 = vmatprep.subr.bf16.mxu0 0
    %150 = vmatpush1.bf16.msra.mxu0 0
    %151 = vmatprep.subr.bf16.mxu0 0
    %152 = vmatpush1.bf16.msra.mxu0 0
    %153 = vmatprep.subr.bf16.mxu0 0
    %154 = vmatpush1.bf16.msra.mxu0 0
    %155 = vmatprep.subr.bf16.mxu0 0
    %156 = vmatpush1.bf16.msra.mxu0 0
    %157 = vmatprep.subr.bf16.mxu0 0
    %158 = vmatpush1.bf16.msra.mxu0 0
    %159 = vmatprep.subr.bf16.mxu0 0
    %160 = vmatpush1.bf16.msra.mxu0 0
    %161 = vmatprep.subr.bf16.mxu0 0
    %162 = vmatpush1.bf16.msra.mxu0 0
    %163 = vmatprep.subr.bf16.mxu0 0
    %164 = vmatpush1.bf16.msra.mxu0 0
    %165 = vmatprep.subr.bf16.mxu0 0
    %166 = vmatpush1.bf16.msra.mxu0 0
    %167 = vmatprep.subr.bf16.mxu0 0
    %168 = vmatpush1.bf16.msra.mxu0 0
    %169 = vmatprep.subr.bf16.mxu0 0
    %170 = vmatpush1.bf16.msra.mxu0 0
    %171 = vmatprep.mubr.bf16.mxu0 0
    %172 = vmatmul.mubr.bf16.gmra.mrb[0].mxu0 %v137
    %v173 = vpop.f32.mrb[0].mxu0
    %v174 = vadd.f32 %v108, %v173
    %v175 = vpop.f32.mrb[0].mxu0
    %v176 = vadd.f32 %v112, %v175
    %v177 = vpop.f32.mrb[0].mxu0
    %v178 = vadd.f32 %v108, %v177
    %v179 = vpop.f32.mrb[0].mxu0
    %v180 = vadd.f32 %v112, %v179
    %181 = vdwg.mxu0
    %v182 = vadd.f32 %v174, %v176
    %183 = vadd.xlane.f32.xlu0 %v182
    %v184 = vpop.xlane.xlu0 %183
    %v185 = vadd.f32 %v178, %v180
    %186 = vadd.xlane.f32.xlu0 %v185
    %v187 = vpop.xlane.xlu0 %186
    %v188 = vrcp.pop 256.0
    %v189 = vmul.f32 %v184, %v188
    %v190 = vmul.f32 %v187, %v188
    %v191 = vmul.f32 %v174, %v174
    %v192 = vmul.f32 %v176, %v176
    %v193 = vmul.f32 %v178, %v178
    %v194 = vmul.f32 %v180, %v180
    %v195 = vadd.f32 %v191, %v192
    %196 = vadd.xlane.f32.xlu0 %v195
    %v197 = vpop.xlane.xlu0 %196
    %v198 = vadd.f32 %v193, %v194
    %199 = vadd.xlane.f32.xlu0 %v198
    %v200 = vpop.xlane.xlu0 %199
    %v201 = vmul.f32 %v197, %v188
    %v202 = vmul.f32 %v200, %v188
    %v203 = vmul.f32 %v189, %v189
    %v204 = vmul.f32 %v190, %v190
    %v205 = vsub.f32 %v201, %v203
    %v206 = vsub.f32 %v202, %v204
    %v207 = vadd.f32 %v205, 1e-05
    %v208 = vadd.f32 %v206, 1e-05
    %v209 = vrsqrt.pop %v207
    %v210 = vrsqrt.pop %v208
    %v211 = vsub.f32 %v174, %v189
    %v212 = vsub.f32 %v176, %v189
    %v213 = vsub.f32 %v178, %v190
    %v214 = vsub.f32 %v180, %v190
    %v215 = vmul.f32 %v211, %v209
    %v216 = vmul.f32 %v212, %v209
    %v217 = vmul.f32 %v213, %v210
    %v218 = vmul.f32 %v214, %v210
    %v220 = vlaneseq
    %v221 = vshrl.u32 %v220, 7
    %v222 = vsub.s32 0, %v221
    %v223 = vrot.slane %v90, %v222
    %v224 = vlaneseq
    %v225 = vshrl.u32 %v224, 7
    %v226 = vsub.s32 1, %v225
    %v227 = vrot.slane %v90, %v226
    %v230 = vmul.f32 %v215, %v223
    %v231 = vmul.f32 %v216, %v227
    %v232 = vmul.f32 %v217, %v223
    %v233 = vmul.f32 %v218, %v227
    %v235 = vlaneseq
    %v236 = vshrl.u32 %v235, 7
    %v237 = vsub.s32 0, %v236
    %v238 = vrot.slane %v92, %v237
    %v239 = vlaneseq
    %v240 = vshrl.u32 %v239, 7
    %v241 = vsub.s32 1, %v240
    %v242 = vrot.slane %v92, %v241
    %v245 = vadd.f32 %v230, %v238
    %v246 = vadd.f32 %v231, %v242
    %v247 = vadd.f32 %v232, %v238
    %v248 = vadd.f32 %v233, %v242
    %v249 = vmax.f32 %v245, 0.0
    %v250 = vmax.f32 %v246, 0.0
    %v251 = vmax.f32 %v247, 0.0
    %v252 = vmax.f32 %v248, 0.0
    %v253 = vpack.c.bf16 %v251, %v249
    %v254 = vpack.c.bf16 %v252, %v250
    %v255 = vld [vmem:[#allocation7] sm:$0xf]
    %v256 = vld [vmem:[#allocation7 + $0x4] sm:$0xf]
    %v257 = vld [vmem:[#allocation7 + $0x8] sm:$0xf]
    %v258 = vld [vmem:[#allocation7 + $0xc] sm:$0xf]
    %v259 = vld [vmem:[#allocation7 + $0x10] sm:$0xf]
    %v260 = vld [vmem:[#allocation7 + $0x14] sm:$0xf]
    %v261 = vld [vmem:[#allocation7 + $0x18] sm:$0xf]
    %v262 = vld [vmem:[#allocation7 + $0x1c] sm:$0xf]
    %v263 = vld [vmem:[#allocation7 + $0x20] sm:$0xf]
    %v264 = vld [vmem:[#allocation7 + $0x24] sm:$0xf]
    %v265 = vld [vmem:[#allocation7 + $0x28] sm:$0xf]
    %v266 = vld [vmem:[#allocation7 + $0x2c] sm:$0xf]
    %v267 = vld [vmem:[#allocation7 + $0x30] sm:$0xf]
    %v268 = vld [vmem:[#allocation7 + $0x34] sm:$0xf]
    %v269 = vld [vmem:[#allocation7 + $0x38] sm:$0xf]
    %v270 = vld [vmem:[#allocation7 + $0x3c] sm:$0xf]
    %v271 = vld [vmem:[#allocation7 + $0x40] sm:$0xf]
    %v272 = vld [vmem:[#allocation7 + $0x44] sm:$0xf]
    %v273 = vld [vmem:[#allocation7 + $0x48] sm:$0xf]
    %v274 = vld [vmem:[#allocation7 + $0x4c] sm:$0xf]
    %v275 = vld [vmem:[#allocation7 + $0x50] sm:$0xf]
    %v276 = vld [vmem:[#allocation7 + $0x54] sm:$0xf]
    %v277 = vld [vmem:[#allocation7 + $0x58] sm:$0xf]
    %v278 = vld [vmem:[#allocation7 + $0x5c] sm:$0xf]
    %v279 = vld [vmem:[#allocation7 + $0x60] sm:$0xf]
    %v280 = vld [vmem:[#allocation7 + $0x64] sm:$0xf]
    %v281 = vld [vmem:[#allocation7 + $0x68] sm:$0xf]
    %v282 = vld [vmem:[#allocation7 + $0x6c] sm:$0xf]
    %v283 = vld [vmem:[#allocation7 + $0x70] sm:$0xf]
    %v284 = vld [vmem:[#allocation7 + $0x74] sm:$0xf]
    %v285 = vld [vmem:[#allocation7 + $0x78] sm:$0xf]
    %v286 = vld [vmem:[#allocation7 + $0x7c] sm:$0xf]
    %v319 = vunpack.c.l.b16 %v255
    %v320 = vunpack.c.l.b16 %v256
    %v321 = vunpack.c.l.b16 %v257
    %v322 = vunpack.c.l.b16 %v258
    %v323 = vunpack.c.l.b16 %v259
    %v324 = vunpack.c.l.b16 %v260
    %v325 = vunpack.c.l.b16 %v261
    %v326 = vunpack.c.l.b16 %v262
    %v327 = vunpack.c.l.b16 %v263
    %v328 = vunpack.c.l.b16 %v264
    %v329 = vunpack.c.l.b16 %v265
    %v330 = vunpack.c.l.b16 %v266
    %v331 = vunpack.c.l.b16 %v267
    %v332 = vunpack.c.l.b16 %v268
    %v333 = vunpack.c.l.b16 %v269
    %v334 = vunpack.c.l.b16 %v270
    %v335 = vunpack.c.l.b16 %v271
    %v336 = vunpack.c.l.b16 %v272
    %v337 = vunpack.c.l.b16 %v273
    %v338 = vunpack.c.l.b16 %v274
    %v339 = vunpack.c.l.b16 %v275
    %v340 = vunpack.c.l.b16 %v276
    %v341 = vunpack.c.l.b16 %v277
    %v342 = vunpack.c.l.b16 %v278
    %v343 = vunpack.c.l.b16 %v279
    %v344 = vunpack.c.l.b16 %v280
    %v345 = vunpack.c.l.b16 %v281
    %v346 = vunpack.c.l.b16 %v282
    %v347 = vunpack.c.l.b16 %v283
    %v348 = vunpack.c.l.b16 %v284
    %v349 = vunpack.c.l.b16 %v285
    %v350 = vunpack.c.l.b16 %v286
    %v351 = vpack.c.b16 %v320, %v319
    %v352 = vpack.c.b16 %v322, %v321
    %v353 = vpack.c.b16 %v324, %v323
    %v354 = vpack.c.b16 %v326, %v325
    %v355 = vpack.c.b16 %v328, %v327
    %v356 = vpack.c.b16 %v330, %v329
    %v357 = vpack.c.b16 %v332, %v331
    %v358 = vpack.c.b16 %v334, %v333
    %v359 = vpack.c.b16 %v336, %v335
    %v360 = vpack.c.b16 %v338, %v337
    %v361 = vpack.c.b16 %v340, %v339
    %v362 = vpack.c.b16 %v342, %v341
    %v363 = vpack.c.b16 %v344, %v343
    %v364 = vpack.c.b16 %v346, %v345
    %v365 = vpack.c.b16 %v348, %v347
    %v366 = vpack.c.b16 %v350, %v349
    %383 = vmatprep.subr.bf16.mxu0 0
    %384 = vmatpush1.bf16.msra.mxu0 %v351
    %385 = vmatprep.subr.bf16.mxu0 0
    %386 = vmatpush1.bf16.msra.mxu0 %v352
    %387 = vmatprep.subr.bf16.mxu0 0
    %388 = vmatpush1.bf16.msra.mxu0 %v353
    %389 = vmatprep.subr.bf16.mxu0 0
    %390 = vmatpush1.bf16.msra.mxu0 %v354
    %391 = vmatprep.subr.bf16.mxu0 0
    %392 = vmatpush1.bf16.msra.mxu0 %v355
    %393 = vmatprep.subr.bf16.mxu0 0
    %394 = vmatpush1.bf16.msra.mxu0 %v356
    %395 = vmatprep.subr.bf16.mxu0 0
    %396 = vmatpush1.bf16.msra.mxu0 %v357
    %397 = vmatprep.subr.bf16.mxu0 0
    %398 = vmatpush1.bf16.msra.mxu0 %v358
    %399 = vmatprep.subr.bf16.mxu0 0
    %400 = vmatpush1.bf16.msra.mxu0 %v359
    %401 = vmatprep.subr.bf16.mxu0 0
    %402 = vmatpush1.bf16.msra.mxu0 %v360
    %403 = vmatprep.subr.bf16.mxu0 0
    %404 = vmatpush1.bf16.msra.mxu0 %v361
    %405 = vmatprep.subr.bf16.mxu0 0
    %406 = vmatpush1.bf16.msra.mxu0 %v362
    %407 = vmatprep.subr.bf16.mxu0 0
    %408 = vmatpush1.bf16.msra.mxu0 %v363
    %409 = vmatprep.subr.bf16.mxu0 0
    %410 = vmatpush1.bf16.msra.mxu0 %v364
    %411 = vmatprep.subr.bf16.mxu0 0
    %412 = vmatpush1.bf16.msra.mxu0 %v365
    %413 = vmatprep.subr.bf16.mxu0 0
    %414 = vmatpush1.bf16.msra.mxu0 %v366
    %415 = vmatprep.mubr.bf16.mxu0 %v254
    %416 = vmatmul.mubr.bf16.gmra.mrb[0].mxu0 %v253
    %v417 = vpop.f32.mrb[0].mxu0
    %v418 = vadd.f32 %v93, %v417
    %v419 = vpop.f32.mrb[0].mxu0
    %v420 = vpop.f32.mrb[0].mxu0
    %v421 = vadd.f32 %v93, %v420
    %v422 = vpop.f32.mrb[0].mxu0
    %423 = vdwg.mxu0
    %424 = vadd.xlane.f32.xlu0 %v418
    %v425 = vpop.xlane.xlu0 %424
    %426 = vadd.xlane.f32.xlu0 %v421
    %v427 = vpop.xlane.xlu0 %426
    %v428 = vrcp.pop 128.0
    %v429 = vmul.f32 %v425, %v428
    %v430 = vmul.f32 %v427, %v428
    %v431 = vmul.f32 %v418, %v418
    %v432 = vmul.f32 %v421, %v421
    %433 = vadd.xlane.f32.xlu0 %v431
    %v434 = vpop.xlane.xlu0 %433
    %435 = vadd.xlane.f32.xlu0 %v432
    %v436 = vpop.xlane.xlu0 %435
    %v437 = vmul.f32 %v434, %v428
    %v438 = vmul.f32 %v436, %v428
    %v439 = vmul.f32 %v429, %v429
    %v440 = vmul.f32 %v430, %v430
    %v441 = vsub.f32 %v437, %v439
    %v442 = vsub.f32 %v438, %v440
    %v443 = vadd.f32 %v441, 1e-05
    %v444 = vadd.f32 %v442, 1e-05
    %v445 = vrsqrt.pop %v443
    %v446 = vrsqrt.pop %v444
    %v447 = vsub.f32 %v418, %v429
    %v448 = vsub.f32 %v421, %v430
    %v449 = vmul.f32 %v447, %v445
    %v450 = vmul.f32 %v448, %v446
    %v451 = vmul.f32 %v449, %v94
    %v452 = vmul.f32 %v450, %v94
    %v453 = vadd.f32 %v451, %v95
    %v454 = vadd.f32 %v452, %v95
    %v455 = vmax.f32 %v453, 0.0
    %v456 = vmax.f32 %v454, 0.0
    %v457 = vpack.c.bf16 %v456, %v455
    %v458 = vld [vmem:[#allocation8] sm:$0xf]
    %v459 = vld [vmem:[#allocation8 + $0x4] sm:$0xf]
    %v460 = vld [vmem:[#allocation8 + $0x8] sm:$0xf]
    %v461 = vld [vmem:[#allocation8 + $0xc] sm:$0xf]
    %v462 = vld [vmem:[#allocation8 + $0x10] sm:$0xf]
    %v463 = vld [vmem:[#allocation8 + $0x14] sm:$0xf]
    %v464 = vld [vmem:[#allocation8 + $0x18] sm:$0xf]
    %v465 = vld [vmem:[#allocation8 + $0x1c] sm:$0xf]
    %v466 = vld [vmem:[#allocation8 + $0x20] sm:$0xf]
    %v467 = vld [vmem:[#allocation8 + $0x24] sm:$0xf]
    %v468 = vld [vmem:[#allocation8 + $0x28] sm:$0xf]
    %v469 = vld [vmem:[#allocation8 + $0x2c] sm:$0xf]
    %v470 = vld [vmem:[#allocation8 + $0x30] sm:$0xf]
    %v471 = vld [vmem:[#allocation8 + $0x34] sm:$0xf]
    %v472 = vld [vmem:[#allocation8 + $0x38] sm:$0xf]
    %v473 = vld [vmem:[#allocation8 + $0x3c] sm:$0xf]
    %v490 = vunpack.c.l.b16 %v458
    %v491 = vunpack.c.l.b16 %v459
    %v492 = vunpack.c.l.b16 %v460
    %v493 = vunpack.c.l.b16 %v461
    %v494 = vunpack.c.l.b16 %v462
    %v495 = vunpack.c.l.b16 %v463
    %v496 = vunpack.c.l.b16 %v464
    %v497 = vunpack.c.l.b16 %v465
    %v498 = vunpack.c.l.b16 %v466
    %v499 = vunpack.c.l.b16 %v467
    %v500 = vunpack.c.l.b16 %v468
    %v501 = vunpack.c.l.b16 %v469
    %v502 = vunpack.c.l.b16 %v470
    %v503 = vunpack.c.l.b16 %v471
    %v504 = vunpack.c.l.b16 %v472
    %v505 = vunpack.c.l.b16 %v473
    %v506 = vpack.c.b16 %v491, %v490
    %v507 = vpack.c.b16 %v493, %v492
    %v508 = vpack.c.b16 %v495, %v494
    %v509 = vpack.c.b16 %v497, %v496
    %v510 = vpack.c.b16 %v499, %v498
    %v511 = vpack.c.b16 %v501, %v500
    %v512 = vpack.c.b16 %v503, %v502
    %v513 = vpack.c.b16 %v505, %v504
    %522 = vmatprep.subr.bf16.mxu0 0
    %523 = vmatpush1.bf16.msra.mxu0 %v506
    %524 = vmatprep.subr.bf16.mxu0 0
    %525 = vmatpush1.bf16.msra.mxu0 %v507
    %526 = vmatprep.subr.bf16.mxu0 0
    %527 = vmatpush1.bf16.msra.mxu0 %v508
    %528 = vmatprep.subr.bf16.mxu0 0
    %529 = vmatpush1.bf16.msra.mxu0 %v509
    %530 = vmatprep.subr.bf16.mxu0 0
    %531 = vmatpush1.bf16.msra.mxu0 %v510
    %532 = vmatprep.subr.bf16.mxu0 0
    %533 = vmatpush1.bf16.msra.mxu0 %v511
    %534 = vmatprep.subr.bf16.mxu0 0
    %535 = vmatpush1.bf16.msra.mxu0 %v512
    %536 = vmatprep.subr.bf16.mxu0 0
    %537 = vmatpush1.bf16.msra.mxu0 %v513
    %538 = vmatprep.subr.bf16.mxu0 0
    %539 = vmatpush1.bf16.msra.mxu0 0
    %540 = vmatprep.subr.bf16.mxu0 0
    %541 = vmatpush1.bf16.msra.mxu0 0
    %542 = vmatprep.subr.bf16.mxu0 0
    %543 = vmatpush1.bf16.msra.mxu0 0
    %544 = vmatprep.subr.bf16.mxu0 0
    %545 = vmatpush1.bf16.msra.mxu0 0
    %546 = vmatprep.subr.bf16.mxu0 0
    %547 = vmatpush1.bf16.msra.mxu0 0
    %548 = vmatprep.subr.bf16.mxu0 0
    %549 = vmatpush1.bf16.msra.mxu0 0
    %550 = vmatprep.subr.bf16.mxu0 0
    %551 = vmatpush1.bf16.msra.mxu0 0
    %552 = vmatprep.subr.bf16.mxu0 0
    %553 = vmatpush1.bf16.msra.mxu0 0
    %554 = vmatprep.mubr.bf16.mxu0 0
    %555 = vmatmul.mubr.bf16.gmra.mrb[0].mxu0 %v457
    %v556 = vpop.f32.mrb[0].mxu0
    %v557 = vadd.f32 %v96, %v556
    %v558 = vpop.f32.mrb[0].mxu0
    %v559 = vpop.f32.mrb[0].mxu0
    %v560 = vadd.f32 %v96, %v559
    %v561 = vpop.f32.mrb[0].mxu0
    %562 = vdwg.mxu0
    %v563 = vlaneseq
    %v564 = vand.u32 %v563, 127
    %vm565 = vcmp.lt.s32.totalorder %v564, 8
    %v566 = vsel %vm565, %v557, -inf
    %v567 = vsel %vm565, %v560, -inf
    %568 = vmax.xlane.f32.xlu0 %v566
    %v569 = vpop.xlane.xlu0 %568
    %570 = vmax.xlane.f32.xlu0 %v567
    %v571 = vpop.xlane.xlu0 %570
    %v572 = vsub.f32 %v566, %v569
    %v573 = vsub.f32 %v567, %v571
    %v574 = vmul.f32 %v572, 1.442695
    %v575 = vpow.pop %v574
    %v576 = vmul.f32 %v573, 1.442695
    %v577 = vpow.pop %v576
    %578 = vadd.xlane.f32.xlu0 %v575
    %v579 = vpop.xlane.xlu0 %578
    %580 = vadd.xlane.f32.xlu0 %v577
    %v581 = vpop.xlane.xlu0 %580
    %v582 = vrcp.pop %v579
    %v583 = vmul.f32 %v575, %v582
    %v584 = vrcp.pop %v581
    %v585 = vmul.f32 %v577, %v584
    %v586 = vsel %vm565, %v583, %v557
    %v587 = vsel %vm565, %v585, %v560
    %v588 = vpack.c.bf16 %v587, %v586
    %v590 = vunpack.c.l.b16 %v588
    %v591 = vunpack.c.h.b16 %v588
    %v592 = vpack.c.b16 %v590, %v590
    %v593 = vpack.c.b16 %v591, %v591
    %596 = vst [vmem:[#allocation11] sm:$0xf] %v592
    %597 = vst [vmem:[#allocation11 + $0x4] sm:$0xf] %v593
    // Predicated region
    $region42: #{tpu_custom_call.1} parent=1 // pred_check
      _
    $region43: #{tpu_custom_call.1} parent=1 // pred_check_branch
      %599 = sbr.rel (0) target = $region45
    $region44: #{tpu_custom_call.1} parent=1 // pred_region
      %s601 = ssub.s32 128, 128
      %602 = vsyncadd [#allocation4], %s601
      %s603 = sshll.u32 [#allocation11], 4
      %s604 = int_to_ptr.vmem [resolvable:$true] %s603
      %609 = dma.vmem_to_hbm [thread:$0]  %s604, 128, %s5, [#allocation4], 64, 64, 4
    $region45: #{tpu_custom_call.1} parent=1 // pred_fallthru
      _
    // Predicated region
    $region46: #{tpu_custom_call.1} parent=1 // pred_check
      _
    $region47: #{tpu_custom_call.1} parent=1 // pred_check_branch
      %611 = sbr.rel (0) target = $region49
    $region48: #{tpu_custom_call.1} parent=1 // pred_region
      %612 = dma.done [#allocation4], 128
    $region49: #{tpu_custom_call.1} parent=1 // pred_fallthru
      _
    %613 = vsyncpa [#allocation3], 1
    %614 = vsyncpa [#allocation6], 1
    %615 = vsyncpa [#allocation9], 1
    %616 = vsyncpa [#allocation4], 1

</llo_original>
